<compile_context>
chip_gen: v7x
topology: tpu7x:2x2x1
jax: 0.10.0
libtpu: 0.0.40
codegen_flags: <defaults>
</compile_context>

<pallas_src>
import functools

import jax
import jax.numpy as jnp
import numpy as np
from jax import lax
from jax.experimental import pallas as pl
from jax.experimental.pallas import tpu as pltpu

EPSILON_FP16 = 1e-05


def _smooth_bce_kernel(pred_ref, actual_ref, cnt_ref, sum_ref, row0_ref, *,
                       row_tile, steps_per_core, full_blocks, n_fold,
                       logit_smooth, clamp, needs_mask):
    c = pl.program_id(0)       # TensorCore (parallel) axis
    i = pl.program_id(1)       # row-block (arbitrary) axis

    @pl.when(i == 0)
    def _init():
        cnt_ref[...] = jnp.zeros_like(cnt_ref)
        sum_ref[...] = jnp.zeros_like(sum_ref)
        row0_ref[...] = jnp.zeros_like(row0_ref)

    x = pred_ref[...].astype(jnp.float32)      # (row_tile, lane_w) logits
    a = actual_ref[...].astype(jnp.float32)    # (row_tile, lane_w) targets

    # clamp |x| <= log((1-eps)/eps)  <=>  sigmoid(x) clipped to [eps, 1-eps]
    xc = jnp.clip(x, -clamp, clamp)
    # BCE-with-logits, stable: softplus(xc) - a*xc
    #   = max(xc,0) - a*xc + log1p(exp(-|xc|))
    t = jnp.exp(-jnp.abs(xc))                  # in (~eps, 1]
    u = 1.0 + t
    # Kahan-compensated log1p(t): u-1 is exact (Sterbenz), so log(u)*t/(u-1)
    # matches log1p(t) to ~1 ulp; u > 1 strictly because t >= ~1e-5 >> 2^-24.
    log1p_t = jnp.log(u) * (t / (u - 1.0))
    loss = jnp.maximum(xc, 0.0) - xc * a + log1p_t

    # Occurrence count per element: (actual == 0) + (sigmoid(pred) <= smooth).
    # NOTE: the threshold test is done in logit space (xc <= logit(smooth));
    # exactly at the boundary it may differ from an f32-sigmoid test by 1 ulp.
    occ = (a == 0.0).astype(jnp.float32) + (xc <= logit_smooth).astype(jnp.float32)

    def accumulate(loss_v, occ_v):
        cnt_ref[0, 0:1, :] += jnp.sum(occ_v, axis=0, keepdims=True)
        sum_ref[0, 0:1, :] += jnp.sum(loss_v, axis=0, keepdims=True)

    if needs_mask:
        gblock = c * steps_per_core + i        # global row-block index

        @pl.when(gblock < full_blocks)         # hot path: fully valid block
        def _full():
            accumulate(loss, occ)

        @pl.when(gblock >= full_blocks)        # partial / padded block(s)
        def _partial():
            nvalid = n_fold - gblock * row_tile        # may be <= 0
            valid = lax.broadcasted_iota(jnp.int32, (row_tile, 1), 0) < nvalid
            accumulate(jnp.where(valid, loss, 0.0), jnp.where(valid, occ, 0.0))
    else:
        accumulate(loss, occ)

    # Original row 0 = lanes [0, o) of folded row 0 (core 0, step 0; block 0
    # is always a fully valid block).
    @pl.when(jnp.logical_and(c == 0, i == 0))
    def _row0():
        row0_ref[0, 0:1, :] = loss[0:1, :]


def _choose_fold(n, o, max_lane_w=2048):
    """Pick fold | n (copy-free reshape) maximizing lane density of fold*o."""
    best_key, best_f = None, 1
    d = 1
    while d * d <= n:
        if n % d == 0:
            for f in (d, n // d):
                lw = f * o
                if f != 1 and lw > max_lane_w:
                    continue
                density = lw / (((lw + 127) // 128) * 128)
                key = (density, lw >= 128, -f)
                if best_key is None or key > best_key:
                    best_key, best_f = key, f
        d += 1
    return best_f


def smooth_bce_loss(pred, actual, smooth=0.1,
                    target_block_bytes=4 * 1024 * 1024, num_cores=2):
    bs, s, o = pred.shape
    n = bs * s
    total = n * o

    # Lane folding: pack `fold` consecutive rows of the (n, o) matrix into the
    # lane axis (lane c <-> original column c % o).  fold | n, so the reshape
    # below is a free row-major bitcast.
    fold = _choose_fold(n, o)
    lane_w = fold * o
    n_fold = n // fold

    # Row tile: multiple of 8 (or the full row count) keeping the combined
    # (pred + actual) block bytes near target_block_bytes.
    bytes_per_row = lane_w * (pred.dtype.itemsize + actual.dtype.itemsize)
    row_tile_target = max(8, (target_block_bytes // bytes_per_row) // 8 * 8)
    row_tile = n_fold if n_fold <= row_tile_target else row_tile_target
    grid_rows = pl.cdiv(n_fold, row_tile)    # real row blocks (last may be partial)

    cores = min(num_cores, grid_rows)        # leading "parallel" axis (v7x: 2 TCs)
    steps_per_core = pl.cdiv(grid_rows, cores)
    full_blocks = n_fold // row_tile
    needs_mask = cores * steps_per_core * row_tile != n_fold

    pred2 = pred.reshape(n_fold, lane_w)     # copy-free
    actual2 = actual.reshape(n_fold, lane_w)

    if smooth <= 0.0:
        logit_smooth = float("-inf")
    elif smooth >= 1.0:
        logit_smooth = float("inf")
    else:
        logit_smooth = float(np.log(smooth / (1.0 - smooth)))
    clamp = float(np.log((1.0 - EPSILON_FP16) / EPSILON_FP16))

    kernel = functools.partial(
        _smooth_bce_kernel,
        row_tile=row_tile, steps_per_core=steps_per_core,
        full_blocks=full_blocks, n_fold=n_fold,
        logit_smooth=logit_smooth, clamp=clamp, needs_mask=needs_mask,
    )

    def in_map(c, i):
        # Clamp so padded blocks (cores*steps_per_core > grid_rows) stay in
        # bounds; their contribution is masked to zero in-kernel.
        return (jnp.minimum(c * steps_per_core + i, grid_rows - 1), 0)

    # VMEM budget: double-buffered input blocks + ~6 f32-tile temporaries.
    f32_tile = row_tile * lane_w * 4
    in_block = row_tile * lane_w * (pred.dtype.itemsize + actual.dtype.itemsize)
    vmem_limit = int(min(max(2 * in_block + 6 * f32_tile + (2 << 20), 32 << 20),
                         56 << 20))

    acc_shape = jax.ShapeDtypeStruct((cores, 8, lane_w), jnp.float32)
    acc_spec = pl.BlockSpec((1, 8, lane_w), lambda c, i: (c, 0, 0))

    cnt_out, sum_out, row0_out = pl.pallas_call(
        kernel,
        out_shape=(acc_shape, acc_shape, acc_shape),
        grid_spec=pltpu.PrefetchScalarGridSpec(
            num_scalar_prefetch=0,
            grid=(cores, steps_per_core),
            in_specs=[pl.BlockSpec((row_tile, lane_w), in_map),
                      pl.BlockSpec((row_tile, lane_w), in_map)],
            out_specs=(acc_spec, acc_spec, acc_spec),
        ),
        compiler_params=pltpu.CompilerParams(
            dimension_semantics=("parallel", "arbitrary"),
            vmem_limit_bytes=vmem_limit,
        ),
    )(pred2, actual2)

    # Tiny JAX epilogue: combine per-core partials, fold lanes back to columns,
    # zero intersected columns of row 0, take the mean.
    cnt = jnp.sum(cnt_out[:, 0, :], axis=0)             # (lane_w,) per-lane counts
    per_col = jnp.sum(cnt.reshape(fold, o), axis=0)     # (o,)  per-column counts
    row0 = row0_out[0, 0, :o]                           # loss of original row 0
    removed = jnp.sum(jnp.where(per_col > 1.0, row0, 0.0))
    total_sum = jnp.sum(sum_out[:, 0, :])
    loss = (total_sum - removed) / total
    return loss, {}


def _reference(pred, actual, smooth=0.1):
    bs, s, o = pred.shape
    p = jax.nn.sigmoid(pred.reshape(bs * s, o).astype(jnp.float32))
    p = jnp.clip(p, EPSILON_FP16, 1.0 - EPSILON_FP16)
    a = actual.reshape(bs * s, o).astype(jnp.float32)
    loss = -(a * jnp.log(p) + (1.0 - a) * jnp.log(1.0 - p))
    cnt = jnp.sum(a == 0.0, axis=0) + jnp.sum(p <= smooth, axis=0)
    loss = loss.at[0].set(jnp.where(cnt > 1, 0.0, loss[0]))
    return loss.mean()


if __name__ == "__main__":
    key = jax.random.PRNGKey(0)
    k1, k2, k3, k4 = jax.random.split(key, 4)

    # Case 1: small shape (bs=2, s=8, o=16): single core, no masking.
    pred1 = 3.0 * jax.random.normal(k1, (2, 8, 16), dtype=jnp.float32)
    actual1 = jax.random.bernoulli(k2, 0.5, (2, 8, 16)).astype(jnp.float32)
    loss1, _ = smooth_bce_loss(pred1, actual1, smooth=0.1)
    loss1 = jax.block_until_ready(loss1)
    np.testing.assert_allclose(np.asarray(loss1),
                               np.asarray(_reference(pred1, actual1, 0.1)),
                               rtol=1e-5, atol=1e-5)

    # Case 2: ragged shape + tiny blocks to exercise the 2-core parallel split,
    # the partial-block masked path and the lane-fold / row-0 epilogue.
    pred2 = 3.0 * jax.random.normal(k3, (2, 50, 24), dtype=jnp.float32)
    actual2 = jax.random.bernoulli(k4, 0.5, (2, 50, 24)).astype(jnp.float32)
    loss2, _ = smooth_bce_loss(pred2, actual2, smooth=0.1,
                               target_block_bytes=8 * 1024)
    loss2 = jax.block_until_ready(loss2)
    np.testing.assert_allclose(np.asarray(loss2),
                               np.asarray(_reference(pred2, actual2, 0.1)),
                               rtol=1e-5, atol=1e-5)

    print("KERNEL_OK")
</pallas_src>

<mosaic_0001>
module attributes {stable_mosaic.version = 11 : i64} {
  func.func @_smooth_bce_kernel(%arg0: i32, %arg1: i32, %arg2: memref<2x128xf32, #tpu.memory_space<vmem>>, %arg3: memref<2x128xf32, #tpu.memory_space<vmem>>, %arg4: memref<1x8x128xf32, #tpu.memory_space<vmem>>, %arg5: memref<1x8x128xf32, #tpu.memory_space<vmem>>, %arg6: memref<1x8x128xf32, #tpu.memory_space<vmem>>) attributes {dimension_semantics = [#tpu.dimension_semantics<parallel>, #tpu.dimension_semantics<arbitrary>], iteration_bounds = array<i64: 1, 1>, scalar_prefetch = 0 : i64, scratch_operands = 0 : i64, tpu.core_type = #tpu.core_type<tc>, window_params = [{transform_indices = @transform_0, window_bounds = array<i64: 2, 128>}, {transform_indices = @transform_1, window_bounds = array<i64: 2, 128>}, {transform_indices = @transform_2, window_bounds = array<i64: 1, 8, 128>}, {transform_indices = @transform_3, window_bounds = array<i64: 1, 8, 128>}, {transform_indices = @transform_4, window_bounds = array<i64: 1, 8, 128>}]} {
    %c0_i32 = arith.constant 0 : i32
    %0 = arith.cmpi eq, %arg1, %c0_i32 : i32
    %1 = arith.extui %0 : i1 to i32
    %c0_i32_0 = arith.constant 0 : i32
    %2 = arith.cmpi ne, %1, %c0_i32_0 : i32
    scf.if %2 {
      %cst_28 = arith.constant 0.000000e+00 : f32
      %55 = vector.broadcast %cst_28 : f32 to vector<1x8x128xf32>
      %c0_29 = arith.constant 0 : index
      %c0_30 = arith.constant 0 : index
      %c0_31 = arith.constant 0 : index
      %56 = vector.load %arg4[%c0_29, %c0_30, %c0_31] : memref<1x8x128xf32, #tpu.memory_space<vmem>>, vector<1x8x128xf32>
      tpu.vector_store %arg4[%c0_29, %c0_30, %c0_31], %55 {strides = array<i32>} : memref<1x8x128xf32, #tpu.memory_space<vmem>>, vector<1x8x128xf32>,
      %cst_32 = arith.constant 0.000000e+00 : f32
      %57 = vector.broadcast %cst_32 : f32 to vector<1x8x128xf32>
      %c0_33 = arith.constant 0 : index
      %c0_34 = arith.constant 0 : index
      %c0_35 = arith.constant 0 : index
      %58 = vector.load %arg5[%c0_33, %c0_34, %c0_35] : memref<1x8x128xf32, #tpu.memory_space<vmem>>, vector<1x8x128xf32>
      tpu.vector_store %arg5[%c0_33, %c0_34, %c0_35], %57 {strides = array<i32>} : memref<1x8x128xf32, #tpu.memory_space<vmem>>, vector<1x8x128xf32>,
      %cst_36 = arith.constant 0.000000e+00 : f32
      %59 = vector.broadcast %cst_36 : f32 to vector<1x8x128xf32>
      %c0_37 = arith.constant 0 : index
      %c0_38 = arith.constant 0 : index
      %c0_39 = arith.constant 0 : index
      %60 = vector.load %arg6[%c0_37, %c0_38, %c0_39] : memref<1x8x128xf32, #tpu.memory_space<vmem>>, vector<1x8x128xf32>
      tpu.vector_store %arg6[%c0_37, %c0_38, %c0_39], %59 {strides = array<i32>} : memref<1x8x128xf32, #tpu.memory_space<vmem>>, vector<1x8x128xf32>,
    } else {
    }
    %c0 = arith.constant 0 : index
    %c0_1 = arith.constant 0 : index
    %3 = vector.load %arg2[%c0, %c0_1] : memref<2x128xf32, #tpu.memory_space<vmem>>, vector<2x128xf32>
    %c0_2 = arith.constant 0 : index
    %c0_3 = arith.constant 0 : index
    %4 = vector.load %arg3[%c0_2, %c0_3] : memref<2x128xf32, #tpu.memory_space<vmem>>, vector<2x128xf32>
    %cst = arith.constant -11.5129156 : f32
    %cst_4 = arith.constant 11.5129156 : f32
    %5 = vector.broadcast %cst : f32 to vector<2x128xf32>
    %6 = arith.maximumf %5, %3 : vector<2x128xf32>
    %7 = vector.broadcast %cst_4 : f32 to vector<2x128xf32>
    %8 = arith.minimumf %7, %6 : vector<2x128xf32>
    %9 = math.absf %8 : vector<2x128xf32>
    %cst_5 = arith.constant 0.000000e+00 : f32
    %10 = vector.broadcast %cst_5 : f32 to vector<2x128xf32>
    %11 = arith.subf %10, %9 : vector<2x128xf32>
    %12 = math.exp %11 : vector<2x128xf32>
    %cst_6 = arith.constant 1.000000e+00 : f32
    %13 = vector.broadcast %cst_6 : f32 to vector<2x128xf32>
    %14 = arith.addf %13, %12 : vector<2x128xf32>
    %15 = math.log %14 : vector<2x128xf32>
    %cst_7 = arith.constant 1.000000e+00 : f32
    %16 = vector.broadcast %cst_7 : f32 to vector<2x128xf32>
    %17 = arith.subf %14, %16 : vector<2x128xf32>
    %18 = arith.divf %12, %17 : vector<2x128xf32>
    %19 = arith.mulf %15, %18 : vector<2x128xf32>
    %cst_8 = arith.constant 0.000000e+00 : f32
    %20 = vector.broadcast %cst_8 : f32 to vector<2x128xf32>
    %21 = arith.maximumf %8, %20 : vector<2x128xf32>
    %22 = arith.mulf %8, %4 : vector<2x128xf32>
    %23 = arith.subf %21, %22 : vector<2x128xf32>
    %24 = arith.addf %23, %19 : vector<2x128xf32>
    %cst_9 = arith.constant 0.000000e+00 : f32
    %25 = vector.broadcast %cst_9 : f32 to vector<2x128xf32>
    %26 = arith.cmpf oeq, %4, %25 : vector<2x128xf32>
    %27 = arith.extui %26 : vector<2x128xi1> to vector<2x128xi32>
    %28 = arith.sitofp %27 : vector<2x128xi32> to vector<2x128xf32>
    %cst_10 = arith.constant -2.19722462 : f32
    %29 = vector.broadcast %cst_10 : f32 to vector<2x128xf32>
    %30 = arith.cmpf ole, %8, %29 : vector<2x128xf32>
    %31 = arith.extui %30 : vector<2x128xi1> to vector<2x128xi32>
    %32 = arith.sitofp %31 : vector<2x128xi32> to vector<2x128xf32>
    %33 = arith.addf %28, %32 : vector<2x128xf32>
    %c0_11 = arith.constant 0 : index
    %c0_12 = arith.constant 0 : index
    %c0_13 = arith.constant 0 : index
    %34 = vector.load %arg4[%c0_11, %c0_12, %c0_13] : memref<1x8x128xf32, #tpu.memory_space<vmem>>, vector<1x1x128xf32>
    %35 = vector.shape_cast %34 : vector<1x1x128xf32> to vector<1x128xf32>
    %cst_14 = arith.constant dense<0.000000e+00> : vector<128xf32>
    %36 = vector.multi_reduction <add>, %33, %cst_14 [0] : vector<2x128xf32> to vector<128xf32>
    %37 = vector.shape_cast %36 : vector<128xf32> to vector<1x128xf32>
    %38 = arith.addf %35, %37 : vector<1x128xf32>
    %c0_15 = arith.constant 0 : index
    %c0_16 = arith.constant 0 : index
    %c0_17 = arith.constant 0 : index
    %39 = vector.load %arg4[%c0_15, %c0_16, %c0_17] : memref<1x8x128xf32, #tpu.memory_space<vmem>>, vector<1x1x128xf32>
    %40 = vector.shape_cast %39 : vector<1x1x128xf32> to vector<1x128xf32>
    %41 = vector.shape_cast %38 : vector<1x128xf32> to vector<1x1x128xf32>
    tpu.vector_store %arg4[%c0_15, %c0_16, %c0_17], %41 {strides = array<i32>} : memref<1x8x128xf32, #tpu.memory_space<vmem>>, vector<1x1x128xf32>,
    %c0_18 = arith.constant 0 : index
    %c0_19 = arith.constant 0 : index
    %c0_20 = arith.constant 0 : index
    %42 = vector.load %arg5[%c0_18, %c0_19, %c0_20] : memref<1x8x128xf32, #tpu.memory_space<vmem>>, vector<1x1x128xf32>
    %43 = vector.shape_cast %42 : vector<1x1x128xf32> to vector<1x128xf32>
    %cst_21 = arith.constant dense<0.000000e+00> : vector<128xf32>
    %44 = vector.multi_reduction <add>, %24, %cst_21 [0] : vector<2x128xf32> to vector<128xf32>
    %45 = vector.shape_cast %44 : vector<128xf32> to vector<1x128xf32>
    %46 = arith.addf %43, %45 : vector<1x128xf32>
    %c0_22 = arith.constant 0 : index
    %c0_23 = arith.constant 0 : index
    %c0_24 = arith.constant 0 : index
    %47 = vector.load %arg5[%c0_22, %c0_23, %c0_24] : memref<1x8x128xf32, #tpu.memory_space<vmem>>, vector<1x1x128xf32>
    %48 = vector.shape_cast %47 : vector<1x1x128xf32> to vector<1x128xf32>
    %49 = vector.shape_cast %46 : vector<1x128xf32> to vector<1x1x128xf32>
    tpu.vector_store %arg5[%c0_22, %c0_23, %c0_24], %49 {strides = array<i32>} : memref<1x8x128xf32, #tpu.memory_space<vmem>>, vector<1x1x128xf32>,
    %c0_i32_25 = arith.constant 0 : i32
    %50 = arith.cmpi eq, %arg0, %c0_i32_25 : i32
    %c0_i32_26 = arith.constant 0 : i32
    %51 = arith.cmpi eq, %arg1, %c0_i32_26 : i32
    %52 = arith.andi %50, %51 : i1
    %53 = arith.extui %52 : i1 to i32
    %c0_i32_27 = arith.constant 0 : i32
    %54 = arith.cmpi ne, %53, %c0_i32_27 : i32
    scf.if %54 {
      %55 = vector.extract_strided_slice %24 {offsets = [0, 0], sizes = [1, 128], strides = [1, 1]} : vector<2x128xf32> to vector<1x128xf32>
      %c0_28 = arith.constant 0 : index
      %c0_29 = arith.constant 0 : index
      %c0_30 = arith.constant 0 : index
      %56 = vector.load %arg6[%c0_28, %c0_29, %c0_30] : memref<1x8x128xf32, #tpu.memory_space<vmem>>, vector<1x1x128xf32>
      %57 = vector.shape_cast %56 : vector<1x1x128xf32> to vector<1x128xf32>
      %58 = vector.shape_cast %55 : vector<1x128xf32> to vector<1x1x128xf32>
      tpu.vector_store %arg6[%c0_28, %c0_29, %c0_30], %58 {strides = array<i32>} : memref<1x8x128xf32, #tpu.memory_space<vmem>>, vector<1x1x128xf32>,
    } else {
    }
    return
  }
  func.func @transform_0(%arg0: i32, %arg1: i32) -> (i32, i32) {
    %c1_i32 = arith.constant 1 : i32
    %0 = arith.muli %arg0, %c1_i32 : i32
    %1 = arith.addi %0, %arg1 : i32
    %c0_i32 = arith.constant 0 : i32
    %2 = arith.minsi %1, %c0_i32 : i32
    %c0_i32_0 = arith.constant 0 : i32
    %c0_i32_1 = arith.constant 0 : i32
    return %2, %c0_i32_0 : i32, i32
  }
  func.func @transform_1(%arg0: i32, %arg1: i32) -> (i32, i32) {
    %c1_i32 = arith.constant 1 : i32
    %0 = arith.muli %arg0, %c1_i32 : i32
    %1 = arith.addi %0, %arg1 : i32
    %c0_i32 = arith.constant 0 : i32
    %2 = arith.minsi %1, %c0_i32 : i32
    %c0_i32_0 = arith.constant 0 : i32
    %c0_i32_1 = arith.constant 0 : i32
    return %2, %c0_i32_0 : i32, i32
  }
  func.func @transform_2(%arg0: i32, %arg1: i32) -> (i32, i32, i32) {
    %c0_i32 = arith.constant 0 : i32
    %c0_i32_0 = arith.constant 0 : i32
    %c0_i32_1 = arith.constant 0 : i32
    return %arg0, %c0_i32, %c0_i32_0 : i32, i32, i32
  }
  func.func @transform_3(%arg0: i32, %arg1: i32) -> (i32, i32, i32) {
    %c0_i32 = arith.constant 0 : i32
    %c0_i32_0 = arith.constant 0 : i32
    %c0_i32_1 = arith.constant 0 : i32
    return %arg0, %c0_i32, %c0_i32_0 : i32, i32, i32
  }
  func.func @transform_4(%arg0: i32, %arg1: i32) -> (i32, i32, i32) {
    %c0_i32 = arith.constant 0 : i32
    %c0_i32_0 = arith.constant 0 : i32
    %c0_i32_1 = arith.constant 0 : i32
    return %arg0, %c0_i32, %c0_i32_0 : i32, i32, i32
  }
}

</mosaic_0001>

<llo_original>
// kernel: tpu_custom_call.1
$region0: #{tpu_custom_call.1}
  #allocation0 [shape = 'u32[]', space=smem, size = 0x4, offset = 0x4, fixed_abs, tag = 'smem constant byte address 0x4 - core index']
  #allocation1 [shape = 'u32[144,128]{1,0:T(1,128)}', space=vmem, size = 0x12000, scoped, tag = 'internal scratch']
  %s0 = inlined_call_operand.hbm [shape: f32[2,128], index: 0, kind: input, shape index: {}]
  %s1 = inlined_call_operand.vmem [shape: f32[2,128], index: 1, kind: input, shape index: {}]
  %s2 = inlined_call_operand.hbm [shape: f32[1,8,128], index: 2, kind: output, shape index: {0}]
  %s3 = inlined_call_operand.hbm [shape: f32[1,8,128], index: 3, kind: output, shape index: {1}]
  %s4 = inlined_call_operand.hbm [shape: f32[1,8,128], index: 4, kind: output, shape index: {2}]
  %5 = xla_tuple %s2, %s3, %s4
  %s6 = sld [smem:[#allocation0]]
  $region46: #{tpu_custom_call.1} parent=0
    _
  %s8 = ssub.s32 1, %s6
  %s9 = scalar_select 0, %s8, %s6
  $region1: #{tpu_custom_call.1} parent=0
    #allocation2 [shape = 'u8[1024]{0}', space=vmem, size = 0x400, scoped, tag = 'input window, operand 0, single buffered']
    #allocation3 [shape = 's32[1]{0}', space=sflag, size = 0x4, scoped, tag = 'scoped memory for tpu_custom_call.1']
    #allocation4 [shape = 's32[1]{0}', space=sflag, size = 0x4, scoped, tag = 'scoped memory for tpu_custom_call.1']
    #allocation5 [shape = 'u8[4096]{0}', space=vmem, size = 0x1000, scoped, tag = 'output window, operand 0, single buffered']
    #allocation6 [shape = 'u8[4096]{0}', space=vmem, size = 0x1000, scoped, tag = 'output window, operand 1, single buffered']
    #allocation7 [shape = 's32[1]{0}', space=sflag, size = 0x4, scoped, tag = 'scoped memory for tpu_custom_call.1']
    #allocation8 [shape = 'u8[4096]{0}', space=vmem, size = 0x1000, scoped, tag = 'output window, operand 2, single buffered']
    %10 = vsyncpa [#allocation3], 0
    %11 = vsyncpa [#allocation4], 0
    %12 = vsyncpa [#allocation7], 0
    // Predicated region
    $region2: #{tpu_custom_call.1} parent=1 // pred_check
      _
    $region3: #{tpu_custom_call.1} parent=1 // pred_check_branch
      %14 = sbr.rel (0) target = $region5
    $region4: #{tpu_custom_call.1} parent=1 // pred_region
      %s15 = sadd.s32 0, 0
      %p16 = scmp.lt.s32.totalorder %s15, 0
      %s17 = scalar_select %p16, %s15, 0
      %s19 = ssub.s32 32, 32
      %20 = vsyncadd [#allocation3], %s19
      %s21 = smul.addr %s17, 32
      %s22 = scalar_lea.hbm %s0, %s21
      %s24 = sshll.u32 [#allocation2], 4
      %s25 = int_to_ptr.vmem [resolvable:$true] %s24
      %27 = dma.hbm_to_vmem [thread:$0]  %s22, 32, %s25, [#allocation3]
    $region5: #{tpu_custom_call.1} parent=1 // pred_fallthru
      _
    // Predicated region
    $region6: #{tpu_custom_call.1} parent=1 // pred_check
      _
    $region7: #{tpu_custom_call.1} parent=1 // pred_check_branch
      %29 = sbr.rel (0) target = $region9
    $region8: #{tpu_custom_call.1} parent=1 // pred_region
      %s30 = sadd.s32 0, 0
      %p31 = scmp.lt.s32.totalorder %s30, 0
      %s32 = scalar_select %p31, %s30, 0
      %p33 = scmp.lt.s32.totalorder %s32, 0
      %s34 = scalar_select %p33, %s32, 0
      %s35 = smul.addr %s34, 2
      %s36 = scalar_lea.vmem %s1, %s35
      %s37 = sadd.s32 0, 0
      %p38 = scmp.lt.s32.totalorder %s37, 0
      %s39 = scalar_select %p38, %s37, 0
    $region9: #{tpu_custom_call.1} parent=1 // pred_fallthru
      _
    // Predicated region
    $region10: #{tpu_custom_call.1} parent=1 // pred_check
      _
    $region11: #{tpu_custom_call.1} parent=1 // pred_check_branch
      %41 = sbr.rel (0) target = $region13
    $region12: #{tpu_custom_call.1} parent=1 // pred_region
      %42 = dma.done [#allocation3], 32
    $region13: #{tpu_custom_call.1} parent=1 // pred_fallthru
      _
    %s43 = sadd.s32 0, 0
    %p44 = scmp.lt.s32.totalorder %s43, 0
    %s45 = scalar_select %p44, %s43, 0
    %p46 = scmp.lt.s32.totalorder %s45, 0
    %s47 = scalar_select %p46, %s45, 0
    %s48 = smul.addr %s47, 2
    %s49 = scalar_lea.vmem %s1, %s48
    %s50 = sadd.s32 0, 0
    %p51 = scmp.lt.s32.totalorder %s50, 0
    %s52 = scalar_select %p51, %s50, 0
    %s53 = sadd.s32 0, 0
    %p54 = scmp.lt.s32.totalorder %s53, 0
    %s55 = scalar_select %p54, %s53, 0
    %p56 = scmp.lt.s32.totalorder %s55, 0
    %s57 = scalar_select %p56, %s55, 0
    %s58 = smul.addr %s57, 2
    %s59 = scalar_lea.vmem %s1, %s58
    %s60 = sadd.s32 0, 0
    %p61 = scmp.lt.s32.totalorder %s60, 0
    %s62 = scalar_select %p61, %s60, 0
    %p63 = scmp.eq.s32.totalorder 0, 0
    // Predicated region
    $region14: #{tpu_custom_call.1} parent=1 // pred_check
      %p64 = pneg %p63
    $region15: #{tpu_custom_call.1} parent=1 // pred_check_branch
      %66 = sbr.rel (%p64) target = $region17
    $region16: #{tpu_custom_call.1} parent=1 // pred_region
      %67 = vst [vmem:[#allocation5] sm:$0xff] 0.0
      %68 = vst [vmem:[#allocation6] sm:$0xff] 0.0
      %69 = vst [vmem:[#allocation8] sm:$0xff] 0.0
    $region17: #{tpu_custom_call.1} parent=1 // pred_fallthru
      _
    %v70 = vld [vmem:[#allocation2] sm:$0x3]
    %v71 = vld [vmem:[%s59] sm:$0x3]
    %v72 = vmax.f32 %v70, -11.512916
    %v73 = vmin.f32 %v72, 11.512916
    %v74 = vand.u32 2147483647, %v73
    %v75 = vsub.f32 0.0, %v74
    %v76 = vmul.f32 %v75, 1.442695
    %v77 = vpow.pop %v76
    %v78 = vadd.f32 %v77, 1.0
    %v79 = vlog2.pop %v78
    %v80 = vmul.f32 %v79, 0.6931472
    %v81 = vsub.f32 %v78, 1.0
    %v82 = vrcp.pop %v81
    %v83 = vmul.f32 %v77, %v82
    %v84 = vmul.f32 %v80, %v83
    %v85 = vmax.f32 %v73, 0.0
    %v86 = vmul.f32 %v73, %v71
    %v87 = vsub.f32 %v85, %v86
    %v88 = vadd.f32 %v87, %v84
    %vm89 = vcmp.eq.f32.partialorder %v71, 0.0
    %v90 = vsel %vm89, 1, 0
    %v91 = vcvt.s32.f32 %v90
    %vm92 = vcmp.le.f32.partialorder %v73, -2.1972246
    %v93 = vsel %vm92, 1, 0
    %v94 = vcvt.s32.f32 %v93
    %v95 = vadd.f32 %v91, %v94
    %v96 = vld [vmem:[#allocation5] sm:$0x1]
    %vm97 = vcmask 1041408
    %v98 = vsel %vm97, %v95, 0.0
    %v99 = vrot.slane %v98, 4
    %v100 = vadd.f32 %v98, %v99
    %v101 = vrot.slane %v100, 2
    %v102 = vadd.f32 %v100, %v101
    %v103 = vrot.slane %v102, 1
    %v104 = vadd.f32 %v102, %v103
    %v105 = vadd.f32 %v96, %v104
    %106 = vst [vmem:[#allocation5] sm:$0x1] %v105
    %v107 = vld [vmem:[#allocation6] sm:$0x1]
    %v108 = vsel %vm97, %v88, 0.0
    %v109 = vrot.slane %v108, 4
    %v110 = vadd.f32 %v108, %v109
    %v111 = vrot.slane %v110, 2
    %v112 = vadd.f32 %v110, %v111
    %v113 = vrot.slane %v112, 1
    %v114 = vadd.f32 %v112, %v113
    %v115 = vadd.f32 %v107, %v114
    %116 = vst [vmem:[#allocation6] sm:$0x1] %v115
    %p117 = scmp.eq.s32.totalorder 0, 0
    %p118 = pnand %p117, %p63
    %p119 = pneg %p118
    // Predicated region
    $region18: #{tpu_custom_call.1} parent=1 // pred_check
      _
    $region19: #{tpu_custom_call.1} parent=1 // pred_check_branch
      %121 = sbr.rel (%p118) target = $region21
    $region20: #{tpu_custom_call.1} parent=1 // pred_region
      %122 = vst [vmem:[#allocation8] sm:$0x1] %v88
    $region21: #{tpu_custom_call.1} parent=1 // pred_fallthru
      _
    // Predicated region
    $region22: #{tpu_custom_call.1} parent=1 // pred_check
      _
    $region23: #{tpu_custom_call.1} parent=1 // pred_check_branch
      %124 = sbr.rel (0) target = $region25
    $region24: #{tpu_custom_call.1} parent=1 // pred_region
      %s126 = ssub.s32 128, 128
      %127 = vsyncadd [#allocation4], %s126
      %s129 = sshll.u32 [#allocation5], 4
      %s130 = int_to_ptr.vmem [resolvable:$true] %s129
      %132 = dma.vmem_to_hbm [thread:$0]  %s130, 128, %s2, [#allocation4]
    $region25: #{tpu_custom_call.1} parent=1 // pred_fallthru
      _
    // Predicated region
    $region26: #{tpu_custom_call.1} parent=1 // pred_check
      _
    $region27: #{tpu_custom_call.1} parent=1 // pred_check_branch
      %134 = sbr.rel (0) target = $region29
    $region28: #{tpu_custom_call.1} parent=1 // pred_region
      %s136 = ssub.s32 128, 128
      %137 = vsyncadd [#allocation7], %s136
      %s139 = sshll.u32 [#allocation6], 4
      %s140 = int_to_ptr.vmem [resolvable:$true] %s139
      %142 = dma.vmem_to_hbm [thread:$0]  %s140, 128, %s3, [#allocation7]
    $region29: #{tpu_custom_call.1} parent=1 // pred_fallthru
      _
    // Predicated region
    $region30: #{tpu_custom_call.1} parent=1 // pred_check
      _
    $region31: #{tpu_custom_call.1} parent=1 // pred_check_branch
      %144 = sbr.rel (0) target = $region33
    $region32: #{tpu_custom_call.1} parent=1 // pred_region
      %s146 = ssub.s32 128, 128
      %147 = vsyncadd [#allocation7], %s146
      %s149 = sshll.u32 [#allocation8], 4
      %s150 = int_to_ptr.vmem [resolvable:$true] %s149
      %152 = dma.vmem_to_hbm [thread:$0]  %s150, 128, %s4, [#allocation7]
    $region33: #{tpu_custom_call.1} parent=1 // pred_fallthru
      _
    // Predicated region
    $region34: #{tpu_custom_call.1} parent=1 // pred_check
      _
    $region35: #{tpu_custom_call.1} parent=1 // pred_check_branch
      %154 = sbr.rel (0) target = $region37
    $region36: #{tpu_custom_call.1} parent=1 // pred_region
      %155 = dma.done [#allocation4], 128
    $region37: #{tpu_custom_call.1} parent=1 // pred_fallthru
      _
    // Predicated region
    $region38: #{tpu_custom_call.1} parent=1 // pred_check
      _
    $region39: #{tpu_custom_call.1} parent=1 // pred_check_branch
      %157 = sbr.rel (0) target = $region41
    $region40: #{tpu_custom_call.1} parent=1 // pred_region
      %158 = dma.done [#allocation7], 128
    $region41: #{tpu_custom_call.1} parent=1 // pred_fallthru
      _
    // Predicated region
    $region42: #{tpu_custom_call.1} parent=1 // pred_check
      _
    $region43: #{tpu_custom_call.1} parent=1 // pred_check_branch
      %160 = sbr.rel (0) target = $region45
    $region44: #{tpu_custom_call.1} parent=1 // pred_region
      %161 = dma.done [#allocation7], 128
    $region45: #{tpu_custom_call.1} parent=1 // pred_fallthru
      _
    %162 = vsyncpa [#allocation3], 1
    %163 = vsyncpa [#allocation4], 1
    %164 = vsyncpa [#allocation7], 1

</llo_original>
